<compile_context>
chip_gen: v5e
topology: v5e:2x2
jax: 0.10.0
libtpu: 0.0.40
codegen_flags: <defaults>
</compile_context>

<pallas_src>
import functools

import jax
import jax.numpy as jnp
from jax import lax
from jax.experimental import pallas as pl
from jax.experimental.pallas import tpu as pltpu


def _flash_attn_kernel(scale_ref, q_ref, k_ref, v_ref, o_ref,
                       m_ref, l_ref, acc_ref, *, p_drop, seed):
    ni = pl.program_id(2)

    @pl.when(ni == 0)
    def _init():
        m_ref[...] = jnp.full(m_ref.shape, -jnp.inf, jnp.float32)
        l_ref[...] = jnp.zeros(l_ref.shape, jnp.float32)
        acc_ref[...] = jnp.zeros(acc_ref.shape, jnp.float32)

    q = q_ref[0]                       # (TM, D)   input dtype (bf16 fast path)
    k = k_ref[0]                       # (TN, D)
    v = v_ref[0]                       # (TN, Dv)

    # s = q @ k^T without materializing a transpose (contract on D).  Operands
    # stay in the input dtype so bf16 inputs run at the native MXU rate;
    # accumulation is f32.
    s = lax.dot_general(
        q, k,
        dimension_numbers=(((1,), (1,)), ((), ())),
        preferred_element_type=jnp.float32)            # (TM, TN) f32

    # qk.div(1/scale) == qk * scale.  Applied to the f32 scores so the logits
    # stay exact even when q/k are bf16 (re-rounding a scaled bf16 q would
    # perturb the softmax); this also removes the old per-step q rescale+cast.
    s = s * scale_ref[0]

    # Online softmax update.
    m_prev = m_ref[...]                                # (TM, 1)
    m_new = jnp.maximum(m_prev, jnp.max(s, axis=-1, keepdims=True))
    alpha = jnp.exp(m_prev - m_new)                    # rescale old stats
    p = jnp.exp(s - m_new)                             # (TM, TN) f32

    # Denominator uses the *un-dropped* probabilities (softmax first, then
    # dropout, exactly as in the PyTorch module).
    l_ref[...] = alpha * l_ref[...] + jnp.sum(p, axis=-1, keepdims=True)

    # Cast probs to v's dtype so the PV matmul also runs at the bf16 MXU rate.
    p_v = p.astype(v_ref.dtype)
    if 0.0 < p_drop < 1.0:
        # Zero inside the loop on the narrow dtype; defer the 1/(1-p) scaling
        # to the (TM, Dv) output tile.
        pltpu.prng_seed(seed, pl.program_id(0), pl.program_id(1), ni)
        bits = pltpu.bitcast(pltpu.prng_random_bits(p_v.shape), jnp.uint32)
        thresh = jnp.uint32(min(int(p_drop * (2 ** 32)), 2 ** 32 - 1))
        p_v = jnp.where(bits >= thresh, p_v, jnp.zeros_like(p_v))

    acc_ref[...] = alpha * acc_ref[...] + jnp.dot(
        p_v, v, preferred_element_type=jnp.float32)
    m_ref[...] = m_new

    @pl.when(ni == pl.num_programs(2) - 1)
    def _finalize():
        # Exact reciprocal: touches only a (TM, 1) tile once per output block,
        # so it is free and avoids the approx-reciprocal softmax perturbation.
        inv_l = 1.0 / l_ref[...]
        out = acc_ref[...] * inv_l                         # (TM, Dv) f32
        if p_drop >= 1.0:
            out = jnp.zeros_like(out)                      # torch dropout p=1
        elif p_drop > 0.0:
            out = out * (1.0 / (1.0 - p_drop))             # deferred scaling
        o_ref[0] = out.astype(o_ref.dtype)


def attention(q, k, v, scale_factor, *, dropout=0.0, seed=0,
              block_m=256, block_n=1024, out_dtype=None):
    """q: (B, M, D), k: (B, N, D), v: (B, N, Dv), scale_factor: (1,) f32."""
    B, M, D = q.shape
    Bk, N, Dk = k.shape
    Bv, Nv, Dv = v.shape
    assert Dk == D and Nv == N and Bk == B and Bv == B
    out_dtype = q.dtype if out_dtype is None else out_dtype

    # Large tiles amortize per-grid-step pipeline overhead; clamp to the
    # actual extents for small problems.
    tm = min(block_m, M)
    tn = min(block_n, N)
    # TODO(synk): ragged sequences (M % tm or N % tn != 0) would need masking
    # of the partial tile before the online max/sum; hard assert for now.
    assert M % tm == 0 and N % tn == 0, "seq dims must divide the tile sizes"

    kernel = functools.partial(_flash_attn_kernel,
                               p_drop=float(dropout), seed=int(seed))
    grid = (B, M // tm, N // tn)   # B*(M//tm) parallel steps shard across TCs

    # Right-size the VMEM request from the actual (double-buffered) tile
    # footprint instead of a blanket 48 MiB (v7x has only 64 MiB physical).
    in_item = jnp.dtype(q.dtype).itemsize
    out_item = jnp.dtype(out_dtype).itemsize
    tile_bytes = 2 * (tm * D * in_item + tn * D * in_item + tn * Dv * in_item
                      + tm * Dv * out_item)
    scratch_bytes = (tm * Dv + 2 * tm * 128) * 4      # acc + lane-padded m/l
    vmem_limit = int(min(max(2 * (tile_bytes + scratch_bytes), 16 * 2 ** 20),
                         96 * 2 ** 20))

    return pl.pallas_call(
        kernel,
        out_shape=jax.ShapeDtypeStruct((B, M, Dv), out_dtype),
        grid_spec=pltpu.PrefetchScalarGridSpec(
            num_scalar_prefetch=1,                      # scale_factor -> SMEM
            grid=grid,
            in_specs=[
                pl.BlockSpec((1, tm, D), lambda b, mi, ni, s: (b, mi, 0)),
                pl.BlockSpec((1, tn, D), lambda b, mi, ni, s: (b, ni, 0)),
                pl.BlockSpec((1, tn, Dv), lambda b, mi, ni, s: (b, ni, 0)),
            ],
            out_specs=pl.BlockSpec((1, tm, Dv), lambda b, mi, ni, s: (b, mi, 0)),
            scratch_shapes=[
                pltpu.VMEM((tm, 1), jnp.float32),    # running max m
                pltpu.VMEM((tm, 1), jnp.float32),    # running denom l
                pltpu.VMEM((tm, Dv), jnp.float32),   # output accumulator
            ],
        ),
        compiler_params=pltpu.CompilerParams(
            dimension_semantics=("parallel", "parallel", "arbitrary"),
            vmem_limit_bytes=vmem_limit,
        ),
    )(scale_factor, q, k, v)


def _reference(q, k, v, scale_factor):
    # Pure-JAX f32 reference (dropout=0 path), forced to HIGHEST precision so
    # it is the true value of the given inputs (no silent bf16 truncation).
    qf, kf, vf = (x.astype(jnp.float32) for x in (q, k, v))
    qk = jnp.einsum("bmd,bnd->bmn", qf, kf, precision=lax.Precision.HIGHEST)
    scaled = qk * scale_factor[0].astype(jnp.float32)
    probs = jax.nn.softmax(scaled, axis=-1)
    return jnp.einsum("bmn,bnd->bmd", probs, vf, precision=lax.Precision.HIGHEST)


if __name__ == "__main__":
    # Small, mutually-consistent shapes implied by the forward pass
    # (lane-dense Dv=128 output).
    B, M, N, D, Dv = 2, 8, 128, 64, 128
    key = jax.random.PRNGKey(0)
    kq, kk, kv, ks = jax.random.split(key, 4)
    # bf16 q/k/v so both matmuls run at the native MXU rate (perf feedback);
    # the reference recomputes the exact f32 value of the same bf16 inputs.
    q = jax.random.normal(kq, (B, M, D), dtype=jnp.float32).astype(jnp.bfloat16)
    k = jax.random.normal(kk, (B, N, D), dtype=jnp.float32).astype(jnp.bfloat16)
    v = jax.random.normal(kv, (B, N, Dv), dtype=jnp.float32).astype(jnp.bfloat16)
    scale_factor = jax.random.normal(ks, (1,), dtype=jnp.float32)

    dropout = 0.0  # deterministic path for the correctness check
    out = attention(q, k, v, scale_factor, dropout=dropout,
                    out_dtype=jnp.float32)
    out = jax.block_until_ready(out)

    ref = _reference(q, k, v, scale_factor)
    assert out.shape == (B, M, Dv)
    # Only remaining error source is the bf16 rounding of the probabilities
    # fed to the PV matmul (bf16 x bf16 -> f32 QK^T is exact); worst case is
    # ~1e-2 absolute for unit-normal inputs, so 2e-2 has healthy margin.
    max_err = float(jnp.max(jnp.abs(out - ref)))
    assert jnp.allclose(out, ref, atol=2e-2, rtol=2e-2), (
        f"mismatch vs reference (max abs err = {max_err})")
    print("KERNEL_OK")
</pallas_src>

<mosaic_0001>
module attributes {stable_mosaic.version = 11 : i64} {
  func.func @_flash_attn_kernel(%arg0: i32, %arg1: i32, %arg2: i32, %arg3: memref<1xf32, #tpu.memory_space<smem>>, %arg4: memref<1x8x64xbf16, #tpu.memory_space<vmem>>, %arg5: memref<1x128x64xbf16, #tpu.memory_space<vmem>>, %arg6: memref<1x128x128xbf16, #tpu.memory_space<vmem>>, %arg7: memref<1x8x128xf32, #tpu.memory_space<vmem>>, %arg8: memref<8x1xf32, #tpu.memory_space<vmem>>, %arg9: memref<8x1xf32, #tpu.memory_space<vmem>>, %arg10: memref<8x128xf32, #tpu.memory_space<vmem>>) attributes {dimension_semantics = [#tpu.dimension_semantics<parallel>, #tpu.dimension_semantics<parallel>, #tpu.dimension_semantics<arbitrary>], iteration_bounds = array<i64: 2, 1, 1>, scalar_prefetch = 1 : i64, scratch_operands = 3 : i64, tpu.core_type = #tpu.core_type<tc>, window_params = [{transform_indices = @transform_0, window_bounds = array<i64: 1, 8, 64>}, {transform_indices = @transform_1, window_bounds = array<i64: 1, 128, 64>}, {transform_indices = @transform_2, window_bounds = array<i64: 1, 128, 128>}, {transform_indices = @transform_3, window_bounds = array<i64: 1, 8, 128>}]} {
    %c0_i32 = arith.constant 0 : i32
    %0 = arith.cmpi eq, %arg2, %c0_i32 : i32
    %1 = arith.extui %0 : i1 to i32
    %c0_i32_0 = arith.constant 0 : i32
    %2 = arith.cmpi ne, %1, %c0_i32_0 : i32
    scf.if %2 {
      %cst_27 = arith.constant 0xFF800000 : f32
      %39 = vector.broadcast %cst_27 : f32 to vector<8x1xf32>
      %c0_28 = arith.constant 0 : index
      %c0_29 = arith.constant 0 : index
      %40 = vector.load %arg8[%c0_28, %c0_29] : memref<8x1xf32, #tpu.memory_space<vmem>>, vector<8x1xf32>
      tpu.vector_store %arg8[%c0_28, %c0_29], %39 {strides = array<i32>} : memref<8x1xf32, #tpu.memory_space<vmem>>, vector<8x1xf32>,
      %cst_30 = arith.constant 0.000000e+00 : f32
      %41 = vector.broadcast %cst_30 : f32 to vector<8x1xf32>
      %c0_31 = arith.constant 0 : index
      %c0_32 = arith.constant 0 : index
      %42 = vector.load %arg9[%c0_31, %c0_32] : memref<8x1xf32, #tpu.memory_space<vmem>>, vector<8x1xf32>
      tpu.vector_store %arg9[%c0_31, %c0_32], %41 {strides = array<i32>} : memref<8x1xf32, #tpu.memory_space<vmem>>, vector<8x1xf32>,
      %cst_33 = arith.constant 0.000000e+00 : f32
      %43 = vector.broadcast %cst_33 : f32 to vector<8x128xf32>
      %c0_34 = arith.constant 0 : index
      %c0_35 = arith.constant 0 : index
      %44 = vector.load %arg10[%c0_34, %c0_35] : memref<8x128xf32, #tpu.memory_space<vmem>>, vector<8x128xf32>
      tpu.vector_store %arg10[%c0_34, %c0_35], %43 {strides = array<i32>} : memref<8x128xf32, #tpu.memory_space<vmem>>, vector<8x128xf32>,
    } else {
    }
    %c0 = arith.constant 0 : index
    %c0_1 = arith.constant 0 : index
    %c0_2 = arith.constant 0 : index
    %3 = vector.load %arg4[%c0, %c0_1, %c0_2] : memref<1x8x64xbf16, #tpu.memory_space<vmem>>, vector<1x8x64xbf16>
    %4 = vector.shape_cast %3 : vector<1x8x64xbf16> to vector<8x64xbf16>
    %c0_3 = arith.constant 0 : index
    %c0_4 = arith.constant 0 : index
    %c0_5 = arith.constant 0 : index
    %5 = vector.load %arg5[%c0_3, %c0_4, %c0_5] : memref<1x128x64xbf16, #tpu.memory_space<vmem>>, vector<1x128x64xbf16>
    %6 = vector.shape_cast %5 : vector<1x128x64xbf16> to vector<128x64xbf16>
    %c0_6 = arith.constant 0 : index
    %c0_7 = arith.constant 0 : index
    %c0_8 = arith.constant 0 : index
    %7 = vector.load %arg6[%c0_6, %c0_7, %c0_8] : memref<1x128x128xbf16, #tpu.memory_space<vmem>>, vector<1x128x128xbf16>
    %8 = vector.shape_cast %7 : vector<1x128x128xbf16> to vector<128x128xbf16>
    %cst = arith.constant dense<0.000000e+00> : vector<8x128xf32>
    %9 = tpu.matmul %4, %6, %cst {dimension_numbers = #tpu.dot_dimension_numbers<[1], [1], [0], [0], [0, 0, 1, 0], [], []>} : vector<8x64xbf16>, vector<128x64xbf16>, vector<8x128xf32> -> vector<8x128xf32>
    %c0_9 = arith.constant 0 : index
    %10 = memref.load %arg3[%c0_9] : memref<1xf32, #tpu.memory_space<smem>>
    %11 = vector.broadcast %10 : f32 to vector<8x128xf32>
    %12 = arith.mulf %9, %11 : vector<8x128xf32>
    %c0_10 = arith.constant 0 : index
    %c0_11 = arith.constant 0 : index
    %13 = vector.load %arg8[%c0_10, %c0_11] : memref<8x1xf32, #tpu.memory_space<vmem>>, vector<8x1xf32>
    %cst_12 = arith.constant dense<0xFF800000> : vector<8xf32>
    %14 = vector.multi_reduction <maximumf>, %12, %cst_12 [1] : vector<8x128xf32> to vector<8xf32>
    %15 = vector.shape_cast %14 : vector<8xf32> to vector<8x1xf32>
    %16 = arith.maximumf %13, %15 : vector<8x1xf32>
    %17 = arith.subf %13, %16 : vector<8x1xf32>
    %18 = math.exp %17 : vector<8x1xf32>
    %19 = vector.broadcast %16 : vector<8x1xf32> to vector<8x128xf32>
    %20 = arith.subf %12, %19 : vector<8x128xf32>
    %21 = math.exp %20 : vector<8x128xf32>
    %c0_13 = arith.constant 0 : index
    %c0_14 = arith.constant 0 : index
    %22 = vector.load %arg9[%c0_13, %c0_14] : memref<8x1xf32, #tpu.memory_space<vmem>>, vector<8x1xf32>
    %23 = arith.mulf %18, %22 : vector<8x1xf32>
    %cst_15 = arith.constant dense<0.000000e+00> : vector<8xf32>
    %24 = vector.multi_reduction <add>, %21, %cst_15 [1] : vector<8x128xf32> to vector<8xf32>
    %25 = vector.shape_cast %24 : vector<8xf32> to vector<8x1xf32>
    %26 = arith.addf %23, %25 : vector<8x1xf32>
    %c0_16 = arith.constant 0 : index
    %c0_17 = arith.constant 0 : index
    %27 = vector.load %arg9[%c0_16, %c0_17] : memref<8x1xf32, #tpu.memory_space<vmem>>, vector<8x1xf32>
    tpu.vector_store %arg9[%c0_16, %c0_17], %26 {strides = array<i32>} : memref<8x1xf32, #tpu.memory_space<vmem>>, vector<8x1xf32>,
    %28 = arith.truncf %21 : vector<8x128xf32> to vector<8x128xbf16>
    %c0_18 = arith.constant 0 : index
    %c0_19 = arith.constant 0 : index
    %29 = vector.load %arg10[%c0_18, %c0_19] : memref<8x128xf32, #tpu.memory_space<vmem>>, vector<8x128xf32>
    %30 = vector.broadcast %18 : vector<8x1xf32> to vector<8x128xf32>
    %31 = arith.mulf %30, %29 : vector<8x128xf32>
    %cst_20 = arith.constant dense<0.000000e+00> : vector<8x128xf32>
    %32 = tpu.matmul %28, %8, %cst_20 {dimension_numbers = #tpu.dot_dimension_numbers<[1], [0], [0], [1], [0, 0, 1, 1], [], []>} : vector<8x128xbf16>, vector<128x128xbf16>, vector<8x128xf32> -> vector<8x128xf32>
    %33 = arith.addf %31, %32 : vector<8x128xf32>
    %c0_21 = arith.constant 0 : index
    %c0_22 = arith.constant 0 : index
    %34 = vector.load %arg10[%c0_21, %c0_22] : memref<8x128xf32, #tpu.memory_space<vmem>>, vector<8x128xf32>
    tpu.vector_store %arg10[%c0_21, %c0_22], %33 {strides = array<i32>} : memref<8x128xf32, #tpu.memory_space<vmem>>, vector<8x128xf32>,
    %c0_23 = arith.constant 0 : index
    %c0_24 = arith.constant 0 : index
    %35 = vector.load %arg8[%c0_23, %c0_24] : memref<8x1xf32, #tpu.memory_space<vmem>>, vector<8x1xf32>
    tpu.vector_store %arg8[%c0_23, %c0_24], %16 {strides = array<i32>} : memref<8x1xf32, #tpu.memory_space<vmem>>, vector<8x1xf32>,
    %c0_i32_25 = arith.constant 0 : i32
    %36 = arith.cmpi eq, %arg2, %c0_i32_25 : i32
    %37 = arith.extui %36 : i1 to i32
    %c0_i32_26 = arith.constant 0 : i32
    %38 = arith.cmpi ne, %37, %c0_i32_26 : i32
    scf.if %38 {
      %c0_27 = arith.constant 0 : index
      %c0_28 = arith.constant 0 : index
      %39 = vector.load %arg9[%c0_27, %c0_28] : memref<8x1xf32, #tpu.memory_space<vmem>>, vector<8x1xf32>
      %cst_29 = arith.constant 1.000000e+00 : f32
      %40 = vector.broadcast %cst_29 : f32 to vector<8x1xf32>
      %41 = arith.divf %40, %39 : vector<8x1xf32>
      %c0_30 = arith.constant 0 : index
      %c0_31 = arith.constant 0 : index
      %42 = vector.load %arg10[%c0_30, %c0_31] : memref<8x128xf32, #tpu.memory_space<vmem>>, vector<8x128xf32>
      %43 = vector.broadcast %41 : vector<8x1xf32> to vector<8x128xf32>
      %44 = arith.mulf %42, %43 : vector<8x128xf32>
      %c0_32 = arith.constant 0 : index
      %c0_33 = arith.constant 0 : index
      %c0_34 = arith.constant 0 : index
      %45 = vector.load %arg7[%c0_32, %c0_33, %c0_34] : memref<1x8x128xf32, #tpu.memory_space<vmem>>, vector<1x8x128xf32>
      %46 = vector.shape_cast %45 : vector<1x8x128xf32> to vector<8x128xf32>
      %47 = vector.shape_cast %44 : vector<8x128xf32> to vector<1x8x128xf32>
      tpu.vector_store %arg7[%c0_32, %c0_33, %c0_34], %47 {strides = array<i32>} : memref<1x8x128xf32, #tpu.memory_space<vmem>>, vector<1x8x128xf32>,
    } else {
    }
    return
  }
  func.func @transform_0(%arg0: i32, %arg1: i32, %arg2: i32, %arg3: memref<1xf32, #tpu.memory_space<smem>>) -> (i32, i32, i32) {
    %c0_i32 = arith.constant 0 : i32
    %c0_i32_0 = arith.constant 0 : i32
    return %arg0, %arg1, %c0_i32 : i32, i32, i32
  }
  func.func @transform_1(%arg0: i32, %arg1: i32, %arg2: i32, %arg3: memref<1xf32, #tpu.memory_space<smem>>) -> (i32, i32, i32) {
    %c0_i32 = arith.constant 0 : i32
    %c0_i32_0 = arith.constant 0 : i32
    return %arg0, %arg2, %c0_i32 : i32, i32, i32
  }
  func.func @transform_2(%arg0: i32, %arg1: i32, %arg2: i32, %arg3: memref<1xf32, #tpu.memory_space<smem>>) -> (i32, i32, i32) {
    %c0_i32 = arith.constant 0 : i32
    %c0_i32_0 = arith.constant 0 : i32
    return %arg0, %arg2, %c0_i32 : i32, i32, i32
  }
  func.func @transform_3(%arg0: i32, %arg1: i32, %arg2: i32, %arg3: memref<1xf32, #tpu.memory_space<smem>>) -> (i32, i32, i32) {
    %c0_i32 = arith.constant 0 : i32
    %c0_i32_0 = arith.constant 0 : i32
    return %arg0, %arg1, %c0_i32 : i32, i32, i32
  }
}

</mosaic_0001>

<llo_original>
// kernel: tpu_custom_call.1
$region0: #{tpu_custom_call.1}
  #allocation0 [shape = 'u32[]', space=smem, size = 0x4, offset = 0x4, fixed_abs, tag = 'smem constant byte address 0x4 - core index']
  #allocation1 [shape = 'u32[72,128]{1,0:T(1,128)}', space=vmem, size = 0x9000, scoped, tag = 'internal scratch']
  #allocation2 [shape = 'f32[8,1]{1,0:T(8,128)}', space=vmem, size = 0x1000, scoped, tag = 'scratch operand']
  #allocation3 [shape = 'f32[8,1]{1,0:T(8,128)}', space=vmem, size = 0x1000, scoped, tag = 'scratch operand']
  #allocation4 [shape = 'f32[8,128]{1,0:T(8,128)}', space=vmem, size = 0x1000, scoped, tag = 'scratch operand']
  #allocation5 [shape = 's32[1]{0}', space=sflag, size = 0x4, scoped, tag = 'scoped memory for tpu_custom_call.1']
  #allocation6 [shape = 'f32[1]{0:T(128)S(6)}', space=smem, size = 0x200, scoped, tag = 'prefetched SMEM operand 0']
  %s0 = inlined_call_operand.<no memory space> [shape: f32[1], index: 0, kind: input, shape index: {}]
  %s1 = inlined_call_operand.vmem [shape: bf16[2,8,64], index: 1, kind: input, shape index: {}]
  %s2 = inlined_call_operand.vmem [shape: bf16[2,128,64], index: 2, kind: input, shape index: {}]
  %s3 = inlined_call_operand.vmem [shape: bf16[2,128,128], index: 3, kind: input, shape index: {}]
  %s4 = inlined_call_operand.hbm [shape: f32[2,8,128], index: 4, kind: output, shape index: {}]
  %s5 = sld [smem:[#allocation0]]
  $region53: #{tpu_custom_call.1} parent=0
    _
  %s7 = ssub.s32 1, %s5
  %s8 = scalar_select 0, %s7, %s5
  %9 = sst [smem:[#allocation6]] %s0
  $region1: #{tpu_custom_call.1} parent=0
    #allocation7 [shape = 'u8[8192]{0}', space=vmem, size = 0x2000, scoped, tag = 'output window, operand 0']
    #allocation8 [shape = 's32[2]{0}', space=sflag, size = 0x8, scoped, tag = 'scoped memory for tpu_custom_call.1']
    %10 = vsyncpa [#allocation8], 0
    %s11 = scalar_lea.sflag [#allocation8], 1
    %12 = vsyncpa %s11, 0
    loop: start=0, step=1, limit=4
    $region2: #{tpu_custom_call.1} parent=1 // loop_pre_header
      _
    $region3: #{tpu_custom_call.1} parent=1 // loop_header
      %s14 = sphi 0, %s18
      %p15 = scmp.ge.s32.totalorder %s14, 4
      %s21 = sphi 0, %s40
      %s22 = sphi 0, %s36
      %s23 = sphi 0, %s32
      %s24 = sphi 0, %s21
      %s25 = sphi 0, %s22
      %s26 = sphi 0, %s23
      %s27 = sphi 0, %s24
      %s28 = sphi 0, %s25
      %s29 = sphi 0, %s26
      %s45 = sphi 0, %s47
      %s48 = sphi 0, %s45
      %s49 = sphi 0, %s48
      %s65 = sphi 0, %s49
      %s73 = sphi 0, %s75
      %s76 = sphi 0, %s73
      %s77 = sphi 0, %s76
      %s93 = sphi 0, %s77
      %s101 = sphi 0, %s103
      %s104 = sphi 0, %s101
      %s105 = sphi 0, %s104
      %s121 = sphi 0, %s105
      %s129 = sphi 0, %s131
      %s132 = sphi 0, %s129
      %s133 = sphi 0, %s132
      %s149 = sphi 0, %s133
    $region4: #{tpu_custom_call.1} parent=1 // loop_header_branch
      %17 = sbr.rel (%p15) target = $region8
    $region5: #{tpu_custom_call.1} parent=1 // loop_body
      %s19 = ssub.s32 %s14, 1
      %s20 = ssub.s32 %s14, 2
      %s30 = sadd.s32 1, %s23
      %p31 = scmp.ge.s32.totalorder %s30, 1
      %s32 = scalar_select %p31, 0, %s30
      %s33 = sadd.s32 1, %s22
      %s34 = scalar_select %p31, %s33, %s22
      %p35 = scmp.ge.s32.totalorder %s34, 1
      %s36 = scalar_select %p35, 0, %s34
      %s37 = sadd.s32 1, %s21
      %s38 = scalar_select %p35, %s37, %s21
      %p39 = scmp.ge.s32.totalorder %s38, 2
      %s40 = scalar_select %p39, 0, %s38
      %s41 = ssub.s32 %s21, %s40
      %s42 = ssub.s32 %s22, %s36
      %s43 = sor.u32 %s41, %s42
      %p44 = scmp.eq.s32.totalorder %s43, 0
      %s46 = sadd.s32 %s45, 1
      %s47 = scalar_select %p44, %s45, %s46
      %p50 = pneg %p44
      %p51 = scmp.eq.s32.totalorder %s14, 1
      %p52 = por %p50, %p51
      %p53 = scmp.ne.s32.totalorder %s45, %s48
      %p54 = scmp.eq.s32.totalorder %s14, 0
      %p55 = por %p53, %p54
      %p56 = scmp.ne.s32.totalorder %s45, %s48
      %p57 = scmp.eq.s32.totalorder %s19, 1
      %p58 = por %p56, %p57
      %p59 = scmp.ne.s32.totalorder %s48, %s49
      %p60 = scmp.eq.s32.totalorder %s19, 0
      %p61 = por %p59, %p60
      %p62 = scmp.ne.s32.totalorder %s48, %s49
      %p63 = scmp.eq.s32.totalorder %s20, 1
      %p64 = por %p62, %p63
      %p66 = scmp.ne.s32.totalorder %s49, %s65
      %p67 = scmp.eq.s32.totalorder %s20, 0
      %p68 = por %p66, %p67
      %s69 = ssub.s32 %s21, %s40
      %s70 = ssub.s32 %s23, %s32
      %s71 = sor.u32 %s69, %s70
      %p72 = scmp.eq.s32.totalorder %s71, 0
      %s74 = sadd.s32 %s73, 1
      %s75 = scalar_select %p72, %s73, %s74
      %p78 = pneg %p72
      %p79 = scmp.eq.s32.totalorder %s14, 1
      %p80 = por %p78, %p79
      %p81 = scmp.ne.s32.totalorder %s73, %s76
      %p82 = scmp.eq.s32.totalorder %s14, 0
      %p83 = por %p81, %p82
      %p84 = scmp.ne.s32.totalorder %s73, %s76
      %p85 = scmp.eq.s32.totalorder %s19, 1
      %p86 = por %p84, %p85
      %p87 = scmp.ne.s32.totalorder %s76, %s77
      %p88 = scmp.eq.s32.totalorder %s19, 0
      %p89 = por %p87, %p88
      %p90 = scmp.ne.s32.totalorder %s76, %s77
      %p91 = scmp.eq.s32.totalorder %s20, 1
      %p92 = por %p90, %p91
      %p94 = scmp.ne.s32.totalorder %s77, %s93
      %p95 = scmp.eq.s32.totalorder %s20, 0
      %p96 = por %p94, %p95
      %s97 = ssub.s32 %s21, %s40
      %s98 = ssub.s32 %s23, %s32
      %s99 = sor.u32 %s97, %s98
      %p100 = scmp.eq.s32.totalorder %s99, 0
      %s102 = sadd.s32 %s101, 1
      %s103 = scalar_select %p100, %s101, %s102
      %p106 = pneg %p100
      %p107 = scmp.eq.s32.totalorder %s14, 1
      %p108 = por %p106, %p107
      %p109 = scmp.ne.s32.totalorder %s101, %s104
      %p110 = scmp.eq.s32.totalorder %s14, 0
      %p111 = por %p109, %p110
      %p112 = scmp.ne.s32.totalorder %s101, %s104
      %p113 = scmp.eq.s32.totalorder %s19, 1
      %p114 = por %p112, %p113
      %p115 = scmp.ne.s32.totalorder %s104, %s105
      %p116 = scmp.eq.s32.totalorder %s19, 0
      %p117 = por %p115, %p116
      %p118 = scmp.ne.s32.totalorder %s104, %s105
      %p119 = scmp.eq.s32.totalorder %s20, 1
      %p120 = por %p118, %p119
      %p122 = scmp.ne.s32.totalorder %s105, %s121
      %p123 = scmp.eq.s32.totalorder %s20, 0
      %p124 = por %p122, %p123
      %s125 = ssub.s32 %s21, %s40
      %s126 = ssub.s32 %s22, %s36
      %s127 = sor.u32 %s125, %s126
      %p128 = scmp.eq.s32.totalorder %s127, 0
      %s130 = sadd.s32 %s129, 1
      %s131 = scalar_select %p128, %s129, %s130
      %p134 = pneg %p128
      %p135 = scmp.eq.s32.totalorder %s14, 1
      %p136 = por %p134, %p135
      %p137 = scmp.ne.s32.totalorder %s129, %s132
      %p138 = scmp.eq.s32.totalorder %s14, 0
      %p139 = por %p137, %p138
      %p140 = scmp.ne.s32.totalorder %s129, %s132
      %p141 = scmp.eq.s32.totalorder %s19, 1
      %p142 = por %p140, %p141
      %p143 = scmp.ne.s32.totalorder %s132, %s133
      %p144 = scmp.eq.s32.totalorder %s19, 0
      %p145 = por %p143, %p144
      %p146 = scmp.ne.s32.totalorder %s132, %s133
      %p147 = scmp.eq.s32.totalorder %s20, 1
      %p148 = por %p146, %p147
      %p150 = scmp.ne.s32.totalorder %s133, %s149
      %p151 = scmp.eq.s32.totalorder %s20, 0
      %p152 = por %p150, %p151
      %p153 = scmp.le.s32.totalorder 1, %s14
      %p154 = scmp.lt.s32.totalorder %s14, 3
      %p155 = pnand %p153, %p154
      %p156 = pneg %p155
      // Predicated region
      $region9: #{tpu_custom_call.1} parent=5 // pred_check
        _
      $region10: #{tpu_custom_call.1} parent=5 // pred_check_branch
        %158 = sbr.rel (%p155) target = $region12
      $region11: #{tpu_custom_call.1} parent=5 // pred_region
        %s159 = ssub.s32 %s14, 1
      $region12: #{tpu_custom_call.1} parent=5 // pred_fallthru
        _
      %p160 = scmp.lt.s32.totalorder %s14, 2
      // Predicated region
      $region13: #{tpu_custom_call.1} parent=5 // pred_check
        %p161 = pneg %p160
      $region14: #{tpu_custom_call.1} parent=5 // pred_check_branch
        %163 = sbr.rel (%p161) target = $region16
      $region15: #{tpu_custom_call.1} parent=5 // pred_region
        // Predicated region
        $region17: #{tpu_custom_call.1} parent=15 // pred_check
          %p164 = pneg %p55
        $region18: #{tpu_custom_call.1} parent=15 // pred_check_branch
          %166 = sbr.rel (%p164) target = $region20
        $region19: #{tpu_custom_call.1} parent=15 // pred_region
          %p167 = scmp.lt.s32.totalorder %s21, 1
          %s168 = scalar_select %p167, %s21, 1
          %p169 = scmp.lt.s32.totalorder %s22, 0
          %s170 = scalar_select %p169, %s22, 0
          %s171 = sadd.s32 %s170, %s168
          %s172 = smul.addr %s171, 4
          %s173 = scalar_lea.vmem %s1, %s172
        $region20: #{tpu_custom_call.1} parent=15 // pred_fallthru
          _
        // Predicated region
        $region21: #{tpu_custom_call.1} parent=15 // pred_check
          %p174 = pneg %p83
        $region22: #{tpu_custom_call.1} parent=15 // pred_check_branch
          %176 = sbr.rel (%p174) target = $region24
        $region23: #{tpu_custom_call.1} parent=15 // pred_region
          %s177 = smul.u32 16, %s23
          %p178 = scmp.lt.s32.totalorder %s21, 1
          %s179 = scalar_select %p178, %s21, 1
          %p180 = scmp.lt.s32.totalorder %s177, 15
          %s181 = scalar_select %p180, %s177, 15
          %s182 = smul.addr %s179, 16
          %s183 = sadd.s32 %s181, %s182
          %s184 = smul.addr %s183, 4
          %s185 = scalar_lea.vmem %s2, %s184
          %s186 = smul.u32 16, %s23
        $region24: #{tpu_custom_call.1} parent=15 // pred_fallthru
          _
        // Predicated region
        $region25: #{tpu_custom_call.1} parent=15 // pred_check
          %p187 = pneg %p111
        $region26: #{tpu_custom_call.1} parent=15 // pred_check_branch
          %189 = sbr.rel (%p187) target = $region28
        $region27: #{tpu_custom_call.1} parent=15 // pred_region
          %s190 = smul.u32 16, %s23
          %p191 = scmp.lt.s32.totalorder %s21, 1
          %s192 = scalar_select %p191, %s21, 1
          %p193 = scmp.lt.s32.totalorder %s190, 15
          %s194 = scalar_select %p193, %s190, 15
          %s195 = smul.addr %s192, 16
          %s196 = sadd.s32 %s194, %s195
          %s197 = smul.addr %s196, 4
          %s198 = scalar_lea.vmem %s3, %s197
          %s199 = smul.u32 16, %s23
        $region28: #{tpu_custom_call.1} parent=15 // pred_fallthru
          _
      $region16: #{tpu_custom_call.1} parent=5 // pred_fallthru
        _
      %p200 = scmp.le.s32.totalorder 1, %s14
      %p201 = scmp.lt.s32.totalorder %s14, 3
      %p202 = pnand %p200, %p201
      %p203 = pneg %p202
      // Predicated region
      $region29: #{tpu_custom_call.1} parent=5 // pred_check
        _
      $region30: #{tpu_custom_call.1} parent=5 // pred_check_branch
        %205 = sbr.rel (%p202) target = $region32
      $region31: #{tpu_custom_call.1} parent=5 // pred_region
        %s206 = ssub.s32 %s14, 1
        %p207 = scmp.lt.s32.totalorder %s24, 1
        %s208 = scalar_select %p207, %s24, 1
        %p209 = scmp.lt.s32.totalorder %s25, 0
        %s210 = scalar_select %p209, %s25, 0
        %s211 = sadd.s32 %s210, %s208
        %s212 = smul.addr %s211, 4
        %s213 = scalar_lea.vmem %s1, %s212
        %p214 = pneg %p61
        %p215 = pneg %p58
        %s216 = smul.u32 16, %s26
        %p217 = scmp.lt.s32.totalorder %s24, 1
        %s218 = scalar_select %p217, %s24, 1
        %p219 = scmp.lt.s32.totalorder %s216, 15
        %s220 = scalar_select %p219, %s216, 15
        %s221 = smul.addr %s218, 16
        %s222 = sadd.s32 %s220, %s221
        %s223 = smul.addr %s222, 4
        %s224 = scalar_lea.vmem %s2, %s223
        %p225 = pneg %p89
        %p226 = pneg %p86
        %s227 = smul.u32 16, %s26
        %p228 = scmp.lt.s32.totalorder %s24, 1
        %s229 = scalar_select %p228, %s24, 1
        %p230 = scmp.lt.s32.totalorder %s227, 15
        %s231 = scalar_select %p230, %s227, 15
        %s232 = smul.addr %s229, 16
        %s233 = sadd.s32 %s231, %s232
        %s234 = smul.addr %s233, 4
        %s235 = scalar_lea.vmem %s3, %s234
        %p236 = pneg %p117
        %p237 = pneg %p114
        %p238 = pneg %p145
        %p239 = pneg %p142
        %s240 = sand.u32 %s132, 1
        %s241 = scalar_lea.sflag [#allocation8], %s240
        %s242 = sand.u32 %s132, 1
        %s243 = smul.addr %s242, 8
        %s244 = scalar_lea.vmem [#allocation7], %s243
        %p245 = scmp.lt.s32.totalorder %s24, 1
        %s246 = scalar_select %p245, %s24, 1
        %p247 = scmp.lt.s32.totalorder %s25, 0
        %s248 = scalar_select %p247, %s25, 0
        %s249 = sadd.s32 %s248, %s246
        %s250 = smul.addr %s249, 4
        %s251 = scalar_lea.vmem %s1, %s250
        %s252 = smul.u32 16, %s26
        %p253 = scmp.lt.s32.totalorder %s24, 1
        %s254 = scalar_select %p253, %s24, 1
        %p255 = scmp.lt.s32.totalorder %s252, 15
        %s256 = scalar_select %p255, %s252, 15
        %s257 = smul.addr %s254, 16
        %s258 = sadd.s32 %s256, %s257
        %s259 = smul.addr %s258, 4
        %s260 = scalar_lea.vmem %s2, %s259
        %s261 = smul.u32 16, %s26
        %s262 = smul.u32 16, %s26
        %p263 = scmp.lt.s32.totalorder %s24, 1
        %s264 = scalar_select %p263, %s24, 1
        %p265 = scmp.lt.s32.totalorder %s262, 15
        %s266 = scalar_select %p265, %s262, 15
        %s267 = smul.addr %s264, 16
        %s268 = sadd.s32 %s266, %s267
        %s269 = smul.addr %s268, 4
        %s270 = scalar_lea.vmem %s3, %s269
        %s271 = smul.u32 16, %s26
        %p272 = scmp.eq.s32.totalorder %s26, 0
        // Predicated region
        $region33: #{tpu_custom_call.1} parent=31 // pred_check
          %p273 = pneg %p272
        $region34: #{tpu_custom_call.1} parent=31 // pred_check_branch
          %275 = sbr.rel (%p273) target = $region36
        $region35: #{tpu_custom_call.1} parent=31 // pred_region
          %vm276 = vcmask 7168
          %277 = vst.msk [vmem:[#allocation2] sm:$0xff] %vm276, -inf
          %278 = vst.msk [vmem:[#allocation3] sm:$0xff] %vm276, 0.0
          %279 = vst [vmem:[#allocation4] sm:$0xff] 0.0
        $region36: #{tpu_custom_call.1} parent=31 // pred_fallthru
          _
        %v280 = vld [vmem:[%s251] sm:$0xf]
        %v281 = vld [vmem:[%s260] sm:$0xf]
        %v282 = vld [vmem:[%s260 + $0x4] sm:$0xf]
        %v283 = vld [vmem:[%s260 + $0x8] sm:$0xf]
        %v284 = vld [vmem:[%s260 + $0xc] sm:$0xf]
        %v285 = vld [vmem:[%s260 + $0x10] sm:$0xf]
        %v286 = vld [vmem:[%s260 + $0x14] sm:$0xf]
        %v287 = vld [vmem:[%s260 + $0x18] sm:$0xf]
        %v288 = vld [vmem:[%s260 + $0x1c] sm:$0xf]
        %v289 = vld [vmem:[%s260 + $0x20] sm:$0xf]
        %v290 = vld [vmem:[%s260 + $0x24] sm:$0xf]
        %v291 = vld [vmem:[%s260 + $0x28] sm:$0xf]
        %v292 = vld [vmem:[%s260 + $0x2c] sm:$0xf]
        %v293 = vld [vmem:[%s260 + $0x30] sm:$0xf]
        %v294 = vld [vmem:[%s260 + $0x34] sm:$0xf]
        %v295 = vld [vmem:[%s260 + $0x38] sm:$0xf]
        %v296 = vld [vmem:[%s260 + $0x3c] sm:$0xf]
        %v297 = vld [vmem:[%s270] sm:$0xf]
        %v298 = vld [vmem:[%s270 + $0x4] sm:$0xf]
        %v299 = vld [vmem:[%s270 + $0x8] sm:$0xf]
        %v300 = vld [vmem:[%s270 + $0xc] sm:$0xf]
        %v301 = vld [vmem:[%s270 + $0x10] sm:$0xf]
        %v302 = vld [vmem:[%s270 + $0x14] sm:$0xf]
        %v303 = vld [vmem:[%s270 + $0x18] sm:$0xf]
        %v304 = vld [vmem:[%s270 + $0x1c] sm:$0xf]
        %v305 = vld [vmem:[%s270 + $0x20] sm:$0xf]
        %v306 = vld [vmem:[%s270 + $0x24] sm:$0xf]
        %v307 = vld [vmem:[%s270 + $0x28] sm:$0xf]
        %v308 = vld [vmem:[%s270 + $0x2c] sm:$0xf]
        %v309 = vld [vmem:[%s270 + $0x30] sm:$0xf]
        %v310 = vld [vmem:[%s270 + $0x34] sm:$0xf]
        %v311 = vld [vmem:[%s270 + $0x38] sm:$0xf]
        %v312 = vld [vmem:[%s270 + $0x3c] sm:$0xf]
        %v329 = vunpack.c.l.b16 %v281
        %v330 = vunpack.c.l.b16 %v282
        %v331 = vunpack.c.l.b16 %v283
        %v332 = vunpack.c.l.b16 %v284
        %v333 = vunpack.c.l.b16 %v285
        %v334 = vunpack.c.l.b16 %v286
        %v335 = vunpack.c.l.b16 %v287
        %v336 = vunpack.c.l.b16 %v288
        %v337 = vunpack.c.l.b16 %v289
        %v338 = vunpack.c.l.b16 %v290
        %v339 = vunpack.c.l.b16 %v291
        %v340 = vunpack.c.l.b16 %v292
        %v341 = vunpack.c.l.b16 %v293
        %v342 = vunpack.c.l.b16 %v294
        %v343 = vunpack.c.l.b16 %v295
        %v344 = vunpack.c.l.b16 %v296
        %v345 = vpack.c.b16 %v330, %v329
        %v346 = vpack.c.b16 %v332, %v331
        %v347 = vpack.c.b16 %v334, %v333
        %v348 = vpack.c.b16 %v336, %v335
        %v349 = vpack.c.b16 %v338, %v337
        %v350 = vpack.c.b16 %v340, %v339
        %v351 = vpack.c.b16 %v342, %v341
        %v352 = vpack.c.b16 %v344, %v343
        %vm353 = vcmask 523264
        %v355 = vsel %vm353, %v280, 0
        %v358 = vsel %vm353, %v345, 0
        %v361 = vsel %vm353, %v346, 0
        %v364 = vsel %vm353, %v347, 0
        %v367 = vsel %vm353, %v348, 0
        %v370 = vsel %vm353, %v349, 0
        %v373 = vsel %vm353, %v350, 0
        %v376 = vsel %vm353, %v351, 0
        %v379 = vsel %vm353, %v352, 0
        %381 = vmatpush.bf16.xpose.msra.mxu0 %v379
        %382 = vmatpush.bf16.xpose.msra.mxu0 %v376
        %383 = vmatpush.bf16.xpose.msra.mxu0 %v373
        %384 = vmatpush.bf16.xpose.msra.mxu0 %v370
        %385 = vmatpush.bf16.xpose.msra.mxu0 %v367
        %386 = vmatpush.bf16.xpose.msra.mxu0 %v364
        %387 = vmatpush.bf16.xpose.msra.mxu0 %v361
        %388 = vmatpush.bf16.xpose.msra.mxu0 %v358
        %389 = vmatmul.bf16.gmra.mxu0 %v355
        %v390 = vpop.f32.mrf.mxu0
        %v391 = vadd.f32 0.0, %v390
        %v392 = vpop.f32.mrf.mxu0
        %393 = vdwg.mxu0
        %s394 = sld [smem:[#allocation6]]
        %v395 = vstv %s394
        %v396 = vmul.f32 %v391, %v395
        %v397 = vld [vmem:[#allocation2] sm:$0xff]
        %398 = vmax.xlane.f32.xlu0 %v396
        %v399 = vpop.xlane.xlu0 %398
        %v400 = vmax.f32 %v397, %v399
        %v401 = vsub.f32 %v397, %v400
        %v402 = vmul.f32 %v401, 1.442695
        %v403 = vpow.pop %v402
        %405 = vset.pattern.permute.xlu0 0
        %406 = vperm.xlu0 %405, %v400
        %v407 = vpop.permute.xlu0 %406
        %v409 = vsub.f32 %v396, %v407
        %v410 = vmul.f32 %v409, 1.442695
        %v411 = vpow.pop %v410
        %v412 = vld [vmem:[#allocation3] sm:$0xff]
        %v413 = vmul.f32 %v403, %v412
        %414 = vadd.xlane.f32.xlu0 %v411
        %v415 = vpop.xlane.xlu0 %414
        %v416 = vadd.f32 %v413, %v415
        %vm417 = vcmask 7168
        %418 = vst.msk [vmem:[#allocation3] sm:$0xff] %vm417, %v416
        %v419 = vpack.c.bf16 %v411, %v411
        %v420 = vld [vmem:[#allocation4] sm:$0xff]
        %422 = vset.pattern.permute.xlu0 0
        %423 = vperm.xlu0 %422, %v403
        %v424 = vpop.permute.xlu0 %423
        %v426 = vmul.f32 %v424, %v420
        %v443 = vunpack.c.l.b16 %v297
        %v444 = vunpack.c.l.b16 %v298
        %v445 = vunpack.c.l.b16 %v299
        %v446 = vunpack.c.l.b16 %v300
        %v447 = vunpack.c.l.b16 %v301
        %v448 = vunpack.c.l.b16 %v302
        %v449 = vunpack.c.l.b16 %v303
        %v450 = vunpack.c.l.b16 %v304
        %v451 = vunpack.c.l.b16 %v305
        %v452 = vunpack.c.l.b16 %v306
        %v453 = vunpack.c.l.b16 %v307
        %v454 = vunpack.c.l.b16 %v308
        %v455 = vunpack.c.l.b16 %v309
        %v456 = vunpack.c.l.b16 %v310
        %v457 = vunpack.c.l.b16 %v311
        %v458 = vunpack.c.l.b16 %v312
        %v459 = vpack.c.b16 %v444, %v443
        %v460 = vpack.c.b16 %v446, %v445
        %v461 = vpack.c.b16 %v448, %v447
        %v462 = vpack.c.b16 %v450, %v449
        %v463 = vpack.c.b16 %v452, %v451
        %v464 = vpack.c.b16 %v454, %v453
        %v465 = vpack.c.b16 %v456, %v455
        %v466 = vpack.c.b16 %v458, %v457
        %475 = vmatpush.bf16.msra.mxu0 %v466
        %476 = vmatpush.bf16.msra.mxu0 %v465
        %477 = vmatpush.bf16.msra.mxu0 %v464
        %478 = vmatpush.bf16.msra.mxu0 %v463
        %479 = vmatpush.bf16.msra.mxu0 %v462
        %480 = vmatpush.bf16.msra.mxu0 %v461
        %481 = vmatpush.bf16.msra.mxu0 %v460
        %482 = vmatpush.bf16.msra.mxu0 %v459
        %483 = vmatmul.bf16.gmra.mxu0 %v419
        %v484 = vpop.f32.mrf.mxu0
        %v485 = vadd.f32 0.0, %v484
        %v486 = vpop.f32.mrf.mxu0
        %487 = vdwg.mxu0
        %v488 = vadd.f32 %v426, %v485
        %489 = vst [vmem:[#allocation4] sm:$0xff] %v488
        %490 = vst.msk [vmem:[#allocation2] sm:$0xff] %vm417, %v400
        // Predicated region
        $region37: #{tpu_custom_call.1} parent=31 // pred_check
          %p491 = pneg %p272
        $region38: #{tpu_custom_call.1} parent=31 // pred_check_branch
          %493 = sbr.rel (%p491) target = $region40
        $region39: #{tpu_custom_call.1} parent=31 // pred_region
          %v494 = vld [vmem:[#allocation3] sm:$0xff]
          %v495 = vrcp.pop %v494
          %v496 = vmul.f32 %v494, %v495
          %v497 = vsub.f32 1.0, %v496
          %v498 = vmul.f32 %v495, %v497
          %v499 = vadd.f32 %v495, %v498
          %vm500 = vweird.f32 %v494
          %vm501 = vweird.f32 %v495
          %vm502 = vmor %vm500, %vm501
          %v503 = vsel %vm502, %v495, %v499
          %v504 = vand.u32 2147483647, %v494
          %vm505 = vcmp.eq.f32.partialorder %v504, 8.507059e+37
          %v506 = vand.u32 %v494, 2147483648
          %v507 = vor.u32 1.1754944e-38, %v506
          %v508 = vsel %vm505, %v507, %v503
          %v509 = vmul.f32 1.0, %v508
          %v510 = vld [vmem:[#allocation4] sm:$0xff]
          %512 = vset.pattern.permute.xlu0 0
          %513 = vperm.xlu0 %512, %v509
          %v514 = vpop.permute.xlu0 %513
          %v516 = vmul.f32 %v510, %v514
          %517 = vst [vmem:[%s244] sm:$0xff] %v516
        $region40: #{tpu_custom_call.1} parent=31 // pred_fallthru
          _
        %s518 = sand.u32 %s132, 1
        %s519 = scalar_lea.sflag [#allocation8], %s518
        %s520 = sand.u32 %s132, 1
        %s521 = smul.addr %s520, 8
        %s522 = scalar_lea.vmem [#allocation7], %s521
        // Predicated region
        $region41: #{tpu_custom_call.1} parent=31 // pred_check
          %p523 = pneg %p142
        $region42: #{tpu_custom_call.1} parent=31 // pred_check_branch
          %525 = sbr.rel (%p523) target = $region44
        $region43: #{tpu_custom_call.1} parent=31 // pred_region
          %527 = vsyncadd %s519, 0
          %s528 = sadd.s32 %s25, %s24
          %s529 = smul.addr %s528, 8
          %s530 = scalar_lea.hbm %s4, %s529
          %s532 = sshll.u32 %s522, 4
          %s533 = int_to_ptr.vmem [resolvable:$true] %s532
          %s534 = sshll.u32 %s530, 4
          %s535 = int_to_ptr.hbm [resolvable:$true] %s534
          %537 = dma.vmem_to_hbm [thread:$0]  %s533, 128, %s535, %s519
        $region44: #{tpu_custom_call.1} parent=31 // pred_fallthru
          _
      $region32: #{tpu_custom_call.1} parent=5 // pred_fallthru
        _
      %p538 = scmp.le.s32.totalorder 2, %s14
      // Predicated region
      $region45: #{tpu_custom_call.1} parent=5 // pred_check
        %p539 = pneg %p538
      $region46: #{tpu_custom_call.1} parent=5 // pred_check_branch
        %541 = sbr.rel (%p539) target = $region48
      $region47: #{tpu_custom_call.1} parent=5 // pred_region
        %s542 = ssub.s32 %s14, 2
        // Predicated region
        $region49: #{tpu_custom_call.1} parent=47 // pred_check
          %p543 = pneg %p148
        $region50: #{tpu_custom_call.1} parent=47 // pred_check_branch
          %545 = sbr.rel (%p543) target = $region52
        $region51: #{tpu_custom_call.1} parent=47 // pred_region
          %s546 = sand.u32 %s133, 1
          %s547 = scalar_lea.sflag [#allocation8], %s546
          %s548 = sand.u32 %s133, 1
          %s549 = smul.addr %s548, 8
          %s550 = scalar_lea.vmem [#allocation7], %s549
          %552 = dma.done %s547, 128
        $region52: #{tpu_custom_call.1} parent=47 // pred_fallthru
          _
      $region48: #{tpu_custom_call.1} parent=5 // pred_fallthru
        _
    $region6: #{tpu_custom_call.1} parent=1 // loop_footer
      %s18 = sadd.s32 1, %s14
    $region7: #{tpu_custom_call.1} parent=1 // loop_footer_branch
      %13 = sbr.rel target = $region3
    $region8: #{tpu_custom_call.1} parent=1 // loop_exit
      _
    %553 = vsyncpa [#allocation8], 1
    %s554 = scalar_lea.sflag [#allocation8], 1
    %555 = vsyncpa %s554, 1

</llo_original>
